<compile_context>
chip_gen: v6e
topology: v6e:2x2x1
jax: 0.10.0
libtpu: 0.0.40
codegen_flags: <defaults>
</compile_context>

<pallas_src>
import jax
import jax.numpy as jnp
from jax.experimental import pallas as pl
from jax.experimental.pallas import tpu as pltpu


def _round_up(v, m):
    return ((v + m - 1) // m) * m


def _temp_scaled_linear_kernel(inv_t_ref, x_ref, w_ref, b_ref, o_ref, acc_ref):
    # inv_t_ref : SMEM (1, 1)   precomputed 1/temperature (f32)
    # x_ref     : VMEM (tm, tk) bf16 input tile
    # w_ref     : VMEM (tk, tn) bf16 weight tile
    # b_ref     : VMEM (1, tn)  f32 bias tile
    # o_ref     : VMEM (tm, tn) f32 temperature-scaled logits tile
    # acc_ref   : VMEM (tm, tn) f32 accumulator scratch (resident across D steps)
    kk = pl.program_id(2)

    @pl.when(kk == 0)
    def _():
        acc_ref[...] = jnp.zeros_like(acc_ref)

    acc_ref[...] += jnp.dot(x_ref[...], w_ref[...],
                            preferred_element_type=jnp.float32)

    @pl.when(kk == pl.num_programs(2) - 1)
    def _():
        # Fused epilogue: bias add + temperature scale in one expression,
        # single unmasked lane-dense store.
        o_ref[...] = ((acc_ref[...] + b_ref[...]) * inv_t_ref[0, 0]).astype(o_ref.dtype)


def model_with_temperature_forward(x_nchw, weight, bias, temperature):
    """Forward of ModelWithTemperature: model(input) / temperature.

    x_nchw     : [N, C, H, W] float32
    weight     : [D, K] float32  (D = C*H*W)
    bias       : [K]    float32
    temperature: scalar float32  (nn.Parameter, init 1.5)
    returns    : [N, K] float32 temperature-scaled logits
    """
    n = x_nchw.shape[0]
    d = weight.shape[0]
    k = weight.shape[1]

    # ---- MXU / lane friendly tile sizes ----------------------------------
    tm = min(256, _round_up(n, 8))            # sublane-aligned batch tile
    n_pad = _round_up(n, tm)

    k_pad = _round_up(k, 128)                 # lane-dense class axis
    tn = 256 if k_pad % 256 == 0 else 128     # 256-wide on big K (v6e/v7x MXU)

    d_pad = _round_up(d, 128)
    tk = 512 if d_pad % 512 == 0 else 128     # reduction tile along D

    grid = (n_pad // tm, k_pad // tn, d_pad // tk)   # D (reduction) innermost

    # ---- pad operands; zero padding keeps the math exact ------------------
    x2d = x_nchw.reshape(n, d)
    x2d = jnp.pad(x2d, ((0, n_pad - n), (0, d_pad - d))).astype(jnp.bfloat16)
    w_p = jnp.pad(weight.astype(jnp.float32),
                  ((0, d_pad - d), (0, k_pad - k))).astype(jnp.bfloat16)
    b_p = jnp.pad(bias.reshape(1, k).astype(jnp.float32),
                  ((0, 0), (0, k_pad - k)))
    inv_t = (1.0 / jnp.asarray(temperature, jnp.float32)).reshape(1, 1)

    out_padded = pl.pallas_call(
        _temp_scaled_linear_kernel,
        out_shape=jax.ShapeDtypeStruct((n_pad, k_pad), jnp.float32),
        grid_spec=pltpu.PrefetchScalarGridSpec(
            num_scalar_prefetch=0,
            grid=grid,
            in_specs=[
                pl.BlockSpec(memory_space=pltpu.SMEM),               # 1/temperature
                pl.BlockSpec((tm, tk), lambda i, j, kk: (i, kk)),    # x tile
                pl.BlockSpec((tk, tn), lambda i, j, kk: (kk, j)),    # W tile (ignores batch idx)
                pl.BlockSpec((1, tn), lambda i, j, kk: (0, j)),      # bias tile
            ],
            out_specs=pl.BlockSpec((tm, tn), lambda i, j, kk: (i, j)),
            scratch_shapes=[pltpu.VMEM((tm, tn), jnp.float32)],      # f32 accumulator
        ),
        compiler_params=pltpu.CompilerParams(
            dimension_semantics=("parallel", "parallel", "arbitrary"),
        ),
    )(inv_t, x2d, w_p, b_p)

    # Slice padding back off.
    return out_padded[:n, :k]


if __name__ == "__main__":
    key = jax.random.PRNGKey(0)
    kx, kw, kb = jax.random.split(key, 3)

    # Small NCHW input consistent with a classifier wrapped by ModelWithTemperature.
    N, C, H, W = 2, 4, 16, 16
    D = C * H * W            # 1024 flattened features
    K = 16                   # number of classes (logit dim)

    x = jax.random.normal(kx, (N, C, H, W), dtype=jnp.float32)
    weight = jax.random.normal(kw, (D, K), dtype=jnp.float32) * 0.02
    bias = jax.random.normal(kb, (K,), dtype=jnp.float32) * 0.1
    temperature = jnp.float32(1.5)   # nn.Parameter(torch.ones(1) * 1.5)

    out = model_with_temperature_forward(x, weight, bias, temperature)
    out = jax.block_until_ready(out)

    # Pure-JAX f32 reference of the same forward semantics.
    ref = (x.reshape(N, D) @ weight + bias) / temperature
    assert out.shape == (N, K)
    # bf16 operands (f32 accumulation) -> loosen tolerance vs. pure-f32 reference.
    assert jnp.allclose(out, ref, atol=3e-2, rtol=3e-2), "mismatch vs reference"

    # TODO(synk): set_temperature (LBFGS NLL tuning) and _ECELoss are training/eval
    # utilities, not part of the forward pass; they are intentionally not kernelized.
    print("KERNEL_OK")
</pallas_src>

<mosaic_0001>
module attributes {stable_mosaic.version = 11 : i64} {
  func.func @_temp_scaled_linear_kernel(%arg0: i32, %arg1: i32, %arg2: i32, %arg3: memref<1x1xf32, #tpu.memory_space<smem>>, %arg4: memref<8x512xbf16, #tpu.memory_space<vmem>>, %arg5: memref<512x128xbf16, #tpu.memory_space<vmem>>, %arg6: memref<1x128xf32, #tpu.memory_space<vmem>>, %arg7: memref<8x128xf32, #tpu.memory_space<vmem>>, %arg8: memref<8x128xf32, #tpu.memory_space<vmem>>) attributes {dimension_semantics = [#tpu.dimension_semantics<parallel>, #tpu.dimension_semantics<parallel>, #tpu.dimension_semantics<arbitrary>], iteration_bounds = array<i64: 1, 1, 2>, scalar_prefetch = 0 : i64, scratch_operands = 1 : i64, tpu.core_type = #tpu.core_type<tc>, window_params = [{transform_indices = @transform_0, window_bounds = array<i64: 1, 1>}, {transform_indices = @transform_1, window_bounds = array<i64: 8, 512>}, {transform_indices = @transform_2, window_bounds = array<i64: 512, 128>}, {transform_indices = @transform_3, window_bounds = array<i64: 1, 128>}, {transform_indices = @transform_4, window_bounds = array<i64: 8, 128>}]} {
    %c0_i32 = arith.constant 0 : i32
    %0 = arith.cmpi eq, %arg2, %c0_i32 : i32
    %1 = arith.extui %0 : i1 to i32
    %c0_i32_0 = arith.constant 0 : i32
    %2 = arith.cmpi ne, %1, %c0_i32_0 : i32
    scf.if %2 {
      %cst_9 = arith.constant 0.000000e+00 : f32
      %12 = vector.broadcast %cst_9 : f32 to vector<8x128xf32>
      %c0_10 = arith.constant 0 : index
      %c0_11 = arith.constant 0 : index
      %13 = vector.load %arg8[%c0_10, %c0_11] : memref<8x128xf32, #tpu.memory_space<vmem>>, vector<8x128xf32>
      tpu.vector_store %arg8[%c0_10, %c0_11], %12 {strides = array<i32>} : memref<8x128xf32, #tpu.memory_space<vmem>>, vector<8x128xf32>,
    } else {
    }
    %c0 = arith.constant 0 : index
    %c0_1 = arith.constant 0 : index
    %3 = vector.load %arg8[%c0, %c0_1] : memref<8x128xf32, #tpu.memory_space<vmem>>, vector<8x128xf32>
    %c0_2 = arith.constant 0 : index
    %c0_3 = arith.constant 0 : index
    %4 = vector.load %arg4[%c0_2, %c0_3] : memref<8x512xbf16, #tpu.memory_space<vmem>>, vector<8x512xbf16>
    %c0_4 = arith.constant 0 : index
    %c0_5 = arith.constant 0 : index
    %5 = vector.load %arg5[%c0_4, %c0_5] : memref<512x128xbf16, #tpu.memory_space<vmem>>, vector<512x128xbf16>
    %cst = arith.constant dense<0.000000e+00> : vector<8x128xf32>
    %6 = tpu.matmul %4, %5, %cst {dimension_numbers = #tpu.dot_dimension_numbers<[1], [0], [0], [1], [0, 0, 1, 1], [], []>} : vector<8x512xbf16>, vector<512x128xbf16>, vector<8x128xf32> -> vector<8x128xf32>
    %7 = arith.addf %3, %6 : vector<8x128xf32>
    %c0_6 = arith.constant 0 : index
    %c0_7 = arith.constant 0 : index
    %8 = vector.load %arg8[%c0_6, %c0_7] : memref<8x128xf32, #tpu.memory_space<vmem>>, vector<8x128xf32>
    tpu.vector_store %arg8[%c0_6, %c0_7], %7 {strides = array<i32>} : memref<8x128xf32, #tpu.memory_space<vmem>>, vector<8x128xf32>,
    %c1_i32 = arith.constant 1 : i32
    %9 = arith.cmpi eq, %arg2, %c1_i32 : i32
    %10 = arith.extui %9 : i1 to i32
    %c0_i32_8 = arith.constant 0 : i32
    %11 = arith.cmpi ne, %10, %c0_i32_8 : i32
    scf.if %11 {
      %c0_9 = arith.constant 0 : index
      %c0_10 = arith.constant 0 : index
      %12 = vector.load %arg8[%c0_9, %c0_10] : memref<8x128xf32, #tpu.memory_space<vmem>>, vector<8x128xf32>
      %c0_11 = arith.constant 0 : index
      %c0_12 = arith.constant 0 : index
      %13 = vector.load %arg6[%c0_11, %c0_12] : memref<1x128xf32, #tpu.memory_space<vmem>>, vector<1x128xf32>
      %14 = vector.broadcast %13 : vector<1x128xf32> to vector<8x128xf32>
      %15 = arith.addf %12, %14 : vector<8x128xf32>
      %c0_13 = arith.constant 0 : index
      %c0_14 = arith.constant 0 : index
      %16 = memref.load %arg3[%c0_13, %c0_14] : memref<1x1xf32, #tpu.memory_space<smem>>
      %17 = vector.broadcast %16 : f32 to vector<8x128xf32>
      %18 = arith.mulf %15, %17 : vector<8x128xf32>
      %c0_15 = arith.constant 0 : index
      %c0_16 = arith.constant 0 : index
      %19 = vector.load %arg7[%c0_15, %c0_16] : memref<8x128xf32, #tpu.memory_space<vmem>>, vector<8x128xf32>
      tpu.vector_store %arg7[%c0_15, %c0_16], %18 {strides = array<i32>} : memref<8x128xf32, #tpu.memory_space<vmem>>, vector<8x128xf32>,
    } else {
    }
    return
  }
  func.func @transform_0(%arg0: i32, %arg1: i32, %arg2: i32) -> (i32, i32) {
    %c0_i32 = arith.constant 0 : i32
    %c0_i32_0 = arith.constant 0 : i32
    %c0_i32_1 = arith.constant 0 : i32
    return %c0_i32, %c0_i32_0 : i32, i32
  }
  func.func @transform_1(%arg0: i32, %arg1: i32, %arg2: i32) -> (i32, i32) {
    %c0_i32 = arith.constant 0 : i32
    return %arg0, %arg2 : i32, i32
  }
  func.func @transform_2(%arg0: i32, %arg1: i32, %arg2: i32) -> (i32, i32) {
    %c0_i32 = arith.constant 0 : i32
    return %arg2, %arg1 : i32, i32
  }
  func.func @transform_3(%arg0: i32, %arg1: i32, %arg2: i32) -> (i32, i32) {
    %c0_i32 = arith.constant 0 : i32
    %c0_i32_0 = arith.constant 0 : i32
    return %c0_i32, %arg1 : i32, i32
  }
  func.func @transform_4(%arg0: i32, %arg1: i32, %arg2: i32) -> (i32, i32) {
    %c0_i32 = arith.constant 0 : i32
    return %arg0, %arg1 : i32, i32
  }
}

</mosaic_0001>

<llo_original>
// kernel: tpu_custom_call.1
$region0: #{tpu_custom_call.1}
  #allocation0 [shape = 'u32[]', space=smem, size = 0x4, offset = 0x4, fixed_abs, tag = 'smem constant byte address 0x4 - core index']
  #allocation1 [shape = 'u32[144,128]{1,0:T(1,128)}', space=vmem, size = 0x12000, scoped, tag = 'internal scratch']
  #allocation2 [shape = 'f32[8,128]{1,0:T(8,128)}', space=vmem, size = 0x1000, scoped, tag = 'scratch operand']
  #allocation3 [shape = 'f32[1,1]{1,0:T(1,128)S(6)}', space=smem, size = 0x200, scoped, tag = 'scoped memory for tpu_custom_call.1']
  %s0 = inlined_call_operand.<no memory space> [shape: f32[1,1], index: 0, kind: input, shape index: {}]
  %s1 = inlined_call_operand.hbm [shape: bf16[8,1024], index: 1, kind: input, shape index: {}]
  %s2 = inlined_call_operand.hbm [shape: bf16[1024,128], index: 2, kind: input, shape index: {}]
  %s3 = inlined_call_operand.vmem [shape: f32[1,128], index: 3, kind: input, shape index: {}]
  %s4 = inlined_call_operand.hbm [shape: f32[8,128], index: 4, kind: output, shape index: {}]
  %s5 = sld [smem:[#allocation0]]
  $region65: #{tpu_custom_call.1} parent=0
    _
  %s7 = ssub.s32 1, %s5
  %s8 = scalar_select 0, %s7, %s5
  %9 = sst [smem:[#allocation3]] %s0
  $region1: #{tpu_custom_call.1} parent=0
    #allocation4 [shape = 'u8[16384]{0}', space=vmem, size = 0x4000, scoped, tag = 'input window, operand 1']
    #allocation5 [shape = 's32[2]{0}', space=sflag, size = 0x8, scoped, tag = 'scoped memory for tpu_custom_call.1']
    #allocation6 [shape = 's32[2]{0}', space=sflag, size = 0x8, scoped, tag = 'scoped memory for tpu_custom_call.1']
    #allocation7 [shape = 'u8[262144]{0}', space=vmem, size = 0x40000, scoped, tag = 'input window, operand 2']
    #allocation8 [shape = 's32[2]{0}', space=sflag, size = 0x8, scoped, tag = 'scoped memory for tpu_custom_call.1']
    #allocation9 [shape = 'u8[4096]{0}', space=vmem, size = 0x1000, scoped, tag = 'output window, operand 0, single buffered']
    %10 = vsyncpa [#allocation5], 0
    %s11 = scalar_lea.sflag [#allocation5], 1
    %12 = vsyncpa %s11, 0
    %13 = vsyncpa [#allocation8], 0
    %s14 = scalar_lea.sflag [#allocation8], 1
    %15 = vsyncpa %s14, 0
    %16 = vsyncpa [#allocation6], 0
    loop: start=0, step=1, limit=4
    $region2: #{tpu_custom_call.1} parent=1 // loop_pre_header
      _
    $region3: #{tpu_custom_call.1} parent=1 // loop_header
      %s18 = sphi 0, %s22
      %p19 = scmp.ge.s32.totalorder %s18, 4
      %s25 = sphi 0, %s44
      %s26 = sphi 0, %s40
      %s27 = sphi 0, %s36
      %s28 = sphi 0, %s25
      %s29 = sphi 0, %s26
      %s30 = sphi 0, %s27
      %s31 = sphi 0, %s28
      %s32 = sphi 0, %s29
      %s33 = sphi 0, %s30
      %s45 = sphi 0, %s45
      %s47 = sphi 0, %s45
      %s48 = sphi 0, %s47
      %s62 = sphi 0, %s48
      %s70 = sphi 0, %s72
      %s73 = sphi 0, %s70
      %s74 = sphi 0, %s73
      %s90 = sphi 0, %s74
      %s98 = sphi 0, %s100
      %s101 = sphi 0, %s98
      %s102 = sphi 0, %s101
      %s118 = sphi 0, %s102
      %s124 = sphi 0, %s126
      %s127 = sphi 0, %s124
      %s128 = sphi 0, %s127
      %s144 = sphi 0, %s128
      %s152 = sphi 0, %s154
      %s155 = sphi 0, %s152
      %s156 = sphi 0, %s155
      %s172 = sphi 0, %s156
    $region4: #{tpu_custom_call.1} parent=1 // loop_header_branch
      %21 = sbr.rel (%p19) target = $region8
    $region5: #{tpu_custom_call.1} parent=1 // loop_body
      %s23 = ssub.s32 %s18, 1
      %s24 = ssub.s32 %s18, 2
      %s34 = sadd.s32 1, %s27
      %p35 = scmp.ge.s32.totalorder %s34, 2
      %s36 = scalar_select %p35, 0, %s34
      %s37 = sadd.s32 1, %s26
      %s38 = scalar_select %p35, %s37, %s26
      %p39 = scmp.ge.s32.totalorder %s38, 1
      %s40 = scalar_select %p39, 0, %s38
      %s41 = sadd.s32 1, %s25
      %s42 = scalar_select %p39, %s41, %s25
      %p43 = scmp.ge.s32.totalorder %s42, 1
      %s44 = scalar_select %p43, 0, %s42
      %s46 = sadd.s32 %s45, 1
      %p49 = scmp.eq.s32.totalorder %s18, 1
      %p50 = scmp.ne.s32.totalorder %s45, %s47
      %p51 = scmp.eq.s32.totalorder %s18, 0
      %p52 = por %p50, %p51
      %p53 = scmp.ne.s32.totalorder %s45, %s47
      %p54 = scmp.eq.s32.totalorder %s23, 1
      %p55 = por %p53, %p54
      %p56 = scmp.ne.s32.totalorder %s47, %s48
      %p57 = scmp.eq.s32.totalorder %s23, 0
      %p58 = por %p56, %p57
      %p59 = scmp.ne.s32.totalorder %s47, %s48
      %p60 = scmp.eq.s32.totalorder %s24, 1
      %p61 = por %p59, %p60
      %p63 = scmp.ne.s32.totalorder %s48, %s62
      %p64 = scmp.eq.s32.totalorder %s24, 0
      %p65 = por %p63, %p64
      %s66 = ssub.s32 %s25, %s44
      %s67 = ssub.s32 %s27, %s36
      %s68 = sor.u32 %s66, %s67
      %p69 = scmp.eq.s32.totalorder %s68, 0
      %s71 = sadd.s32 %s70, 1
      %s72 = scalar_select %p69, %s70, %s71
      %p75 = pneg %p69
      %p76 = scmp.eq.s32.totalorder %s18, 1
      %p77 = por %p75, %p76
      %p78 = scmp.ne.s32.totalorder %s70, %s73
      %p79 = scmp.eq.s32.totalorder %s18, 0
      %p80 = por %p78, %p79
      %p81 = scmp.ne.s32.totalorder %s70, %s73
      %p82 = scmp.eq.s32.totalorder %s23, 1
      %p83 = por %p81, %p82
      %p84 = scmp.ne.s32.totalorder %s73, %s74
      %p85 = scmp.eq.s32.totalorder %s23, 0
      %p86 = por %p84, %p85
      %p87 = scmp.ne.s32.totalorder %s73, %s74
      %p88 = scmp.eq.s32.totalorder %s24, 1
      %p89 = por %p87, %p88
      %p91 = scmp.ne.s32.totalorder %s74, %s90
      %p92 = scmp.eq.s32.totalorder %s24, 0
      %p93 = por %p91, %p92
      %s94 = ssub.s32 %s27, %s36
      %s95 = ssub.s32 %s26, %s40
      %s96 = sor.u32 %s94, %s95
      %p97 = scmp.eq.s32.totalorder %s96, 0
      %s99 = sadd.s32 %s98, 1
      %s100 = scalar_select %p97, %s98, %s99
      %p103 = pneg %p97
      %p104 = scmp.eq.s32.totalorder %s18, 1
      %p105 = por %p103, %p104
      %p106 = scmp.ne.s32.totalorder %s98, %s101
      %p107 = scmp.eq.s32.totalorder %s18, 0
      %p108 = por %p106, %p107
      %p109 = scmp.ne.s32.totalorder %s98, %s101
      %p110 = scmp.eq.s32.totalorder %s23, 1
      %p111 = por %p109, %p110
      %p112 = scmp.ne.s32.totalorder %s101, %s102
      %p113 = scmp.eq.s32.totalorder %s23, 0
      %p114 = por %p112, %p113
      %p115 = scmp.ne.s32.totalorder %s101, %s102
      %p116 = scmp.eq.s32.totalorder %s24, 1
      %p117 = por %p115, %p116
      %p119 = scmp.ne.s32.totalorder %s102, %s118
      %p120 = scmp.eq.s32.totalorder %s24, 0
      %p121 = por %p119, %p120
      %s122 = ssub.s32 %s26, %s40
      %p123 = scmp.eq.s32.totalorder %s122, 0
      %s125 = sadd.s32 %s124, 1
      %s126 = scalar_select %p123, %s124, %s125
      %p129 = pneg %p123
      %p130 = scmp.eq.s32.totalorder %s18, 1
      %p131 = por %p129, %p130
      %p132 = scmp.ne.s32.totalorder %s124, %s127
      %p133 = scmp.eq.s32.totalorder %s18, 0
      %p134 = por %p132, %p133
      %p135 = scmp.ne.s32.totalorder %s124, %s127
      %p136 = scmp.eq.s32.totalorder %s23, 1
      %p137 = por %p135, %p136
      %p138 = scmp.ne.s32.totalorder %s127, %s128
      %p139 = scmp.eq.s32.totalorder %s23, 0
      %p140 = por %p138, %p139
      %p141 = scmp.ne.s32.totalorder %s127, %s128
      %p142 = scmp.eq.s32.totalorder %s24, 1
      %p143 = por %p141, %p142
      %p145 = scmp.ne.s32.totalorder %s128, %s144
      %p146 = scmp.eq.s32.totalorder %s24, 0
      %p147 = por %p145, %p146
      %s148 = ssub.s32 %s25, %s44
      %s149 = ssub.s32 %s26, %s40
      %s150 = sor.u32 %s148, %s149
      %p151 = scmp.eq.s32.totalorder %s150, 0
      %s153 = sadd.s32 %s152, 1
      %s154 = scalar_select %p151, %s152, %s153
      %p157 = pneg %p151
      %p158 = scmp.eq.s32.totalorder %s18, 1
      %p159 = por %p157, %p158
      %p160 = scmp.ne.s32.totalorder %s152, %s155
      %p161 = scmp.eq.s32.totalorder %s18, 0
      %p162 = por %p160, %p161
      %p163 = scmp.ne.s32.totalorder %s152, %s155
      %p164 = scmp.eq.s32.totalorder %s23, 1
      %p165 = por %p163, %p164
      %p166 = scmp.ne.s32.totalorder %s155, %s156
      %p167 = scmp.eq.s32.totalorder %s23, 0
      %p168 = por %p166, %p167
      %p169 = scmp.ne.s32.totalorder %s155, %s156
      %p170 = scmp.eq.s32.totalorder %s24, 1
      %p171 = por %p169, %p170
      %p173 = scmp.ne.s32.totalorder %s156, %s172
      %p174 = scmp.eq.s32.totalorder %s24, 0
      %p175 = por %p173, %p174
      %p176 = scmp.le.s32.totalorder 1, %s18
      %p177 = scmp.lt.s32.totalorder %s18, 3
      %p178 = pnand %p176, %p177
      %p179 = pneg %p178
      // Predicated region
      $region9: #{tpu_custom_call.1} parent=5 // pred_check
        _
      $region10: #{tpu_custom_call.1} parent=5 // pred_check_branch
        %181 = sbr.rel (%p178) target = $region12
      $region11: #{tpu_custom_call.1} parent=5 // pred_region
        %s182 = ssub.s32 %s18, 1
        // Predicated region
        $region13: #{tpu_custom_call.1} parent=11 // pred_check
          %p183 = pneg %p58
        $region14: #{tpu_custom_call.1} parent=11 // pred_check_branch
          %185 = sbr.rel (%p183) target = $region16
        $region15: #{tpu_custom_call.1} parent=11 // pred_region
          _
        $region16: #{tpu_custom_call.1} parent=11 // pred_fallthru
          _
        // Predicated region
        $region17: #{tpu_custom_call.1} parent=11 // pred_check
          %p186 = pneg %p140
        $region18: #{tpu_custom_call.1} parent=11 // pred_check_branch
          %188 = sbr.rel (%p186) target = $region20
        $region19: #{tpu_custom_call.1} parent=11 // pred_region
          %p189 = scmp.lt.s32.totalorder %s29, 0
          %s190 = scalar_select %p189, %s29, 0
          %s191 = scalar_lea.vmem %s3, %s190
        $region20: #{tpu_custom_call.1} parent=11 // pred_fallthru
          _
      $region12: #{tpu_custom_call.1} parent=5 // pred_fallthru
        _
      %p192 = scmp.lt.s32.totalorder %s18, 2
      // Predicated region
      $region21: #{tpu_custom_call.1} parent=5 // pred_check
        %p193 = pneg %p192
      $region22: #{tpu_custom_call.1} parent=5 // pred_check_branch
        %195 = sbr.rel (%p193) target = $region24
      $region23: #{tpu_custom_call.1} parent=5 // pred_region
        // Predicated region
        $region25: #{tpu_custom_call.1} parent=23 // pred_check
          %p196 = pneg %p80
        $region26: #{tpu_custom_call.1} parent=23 // pred_check_branch
          %198 = sbr.rel (%p196) target = $region28
        $region27: #{tpu_custom_call.1} parent=23 // pred_region
          %s199 = sand.u32 %s70, 1
          %s200 = scalar_lea.sflag [#allocation5], %s199
          %s201 = sand.u32 %s70, 1
          %s202 = smul.addr %s201, 16
          %s203 = scalar_lea.vmem [#allocation4], %s202
          %s204 = smul.u32 4, %s27
          %s206 = ssub.s32 256, 256
          %207 = vsyncadd %s200, %s206
          %s208 = smul.addr %s25, 8
          %s209 = sadd.s32 %s204, %s208
          %s210 = smul.addr %s209, 64
          %s211 = scalar_lea.hbm %s1, %s210
          %s213 = sshll.u32 %s203, 4
          %s214 = int_to_ptr.vmem [resolvable:$true] %s213
          %216 = dma.hbm_to_vmem [thread:$0]  %s211, 256, %s214, %s200
        $region28: #{tpu_custom_call.1} parent=23 // pred_fallthru
          _
        // Predicated region
        $region29: #{tpu_custom_call.1} parent=23 // pred_check
          %p217 = pneg %p108
        $region30: #{tpu_custom_call.1} parent=23 // pred_check_branch
          %219 = sbr.rel (%p217) target = $region32
        $region31: #{tpu_custom_call.1} parent=23 // pred_region
          %s220 = sand.u32 %s98, 1
          %s221 = scalar_lea.sflag [#allocation8], %s220
          %s222 = sand.u32 %s98, 1
          %s223 = smul.addr %s222, 256
          %s224 = scalar_lea.vmem [#allocation7], %s223
          %s225 = smul.u32 64, %s27
          %s227 = ssub.s32 4096, 4096
          %228 = vsyncadd %s221, %s227
          %s229 = sadd.s32 %s26, %s225
          %s230 = smul.addr %s229, 64
          %s231 = scalar_lea.hbm %s2, %s230
          %s232 = sshll.u32 %s224, 4
          %s233 = int_to_ptr.vmem [resolvable:$true] %s232
          %238 = dma.hbm_to_vmem [thread:$0]  %s231, 4096, %s233, %s221, 64, 64, 4
        $region32: #{tpu_custom_call.1} parent=23 // pred_fallthru
          _
      $region24: #{tpu_custom_call.1} parent=5 // pred_fallthru
        _
      %p239 = scmp.le.s32.totalorder 1, %s18
      %p240 = scmp.lt.s32.totalorder %s18, 3
      %p241 = pnand %p239, %p240
      %p242 = pneg %p241
      // Predicated region
      $region33: #{tpu_custom_call.1} parent=5 // pred_check
        _
      $region34: #{tpu_custom_call.1} parent=5 // pred_check_branch
        %244 = sbr.rel (%p241) target = $region36
      $region35: #{tpu_custom_call.1} parent=5 // pred_region
        %s245 = ssub.s32 %s18, 1
        %s246 = sand.u32 %s73, 1
        %s247 = scalar_lea.sflag [#allocation5], %s246
        %s248 = sand.u32 %s73, 1
        %s249 = smul.addr %s248, 16
        %s250 = scalar_lea.vmem [#allocation4], %s249
        // Predicated region
        $region37: #{tpu_custom_call.1} parent=35 // pred_check
          %p251 = pneg %p86
        $region38: #{tpu_custom_call.1} parent=35 // pred_check_branch
          %253 = sbr.rel (%p251) target = $region40
        $region39: #{tpu_custom_call.1} parent=35 // pred_region
          %254 = dma.done %s247, 256
        $region40: #{tpu_custom_call.1} parent=35 // pred_fallthru
          _
        %s255 = sand.u32 %s101, 1
        %s256 = scalar_lea.sflag [#allocation8], %s255
        %s257 = sand.u32 %s101, 1
        %s258 = smul.addr %s257, 256
        %s259 = scalar_lea.vmem [#allocation7], %s258
        // Predicated region
        $region41: #{tpu_custom_call.1} parent=35 // pred_check
          %p260 = pneg %p114
        $region42: #{tpu_custom_call.1} parent=35 // pred_check_branch
          %262 = sbr.rel (%p260) target = $region44
        $region43: #{tpu_custom_call.1} parent=35 // pred_region
          %263 = dma.done %s256, 4096
        $region44: #{tpu_custom_call.1} parent=35 // pred_fallthru
          _
        %p264 = pneg %p58
        %p265 = pneg %p55
        %s266 = sand.u32 %s73, 1
        %s267 = scalar_lea.sflag [#allocation5], %s266
        %s268 = sand.u32 %s73, 1
        %s269 = smul.addr %s268, 16
        %s270 = scalar_lea.vmem [#allocation4], %s269
        %p271 = pneg %p86
        %p272 = pneg %p83
        %s273 = sand.u32 %s101, 1
        %s274 = scalar_lea.sflag [#allocation8], %s273
        %s275 = sand.u32 %s101, 1
        %s276 = smul.addr %s275, 256
        %s277 = scalar_lea.vmem [#allocation7], %s276
        %p278 = pneg %p114
        %p279 = pneg %p111
        %p280 = scmp.lt.s32.totalorder %s29, 0
        %s281 = scalar_select %p280, %s29, 0
        %s282 = scalar_lea.vmem %s3, %s281
        %p283 = pneg %p140
        %p284 = pneg %p137
        %p285 = pneg %p168
        %p286 = pneg %p165
        %s287 = smul.u32 4, %s30
        %s288 = smul.u32 64, %s30
        %p289 = scmp.lt.s32.totalorder %s29, 0
        %s290 = scalar_select %p289, %s29, 0
        %s291 = scalar_lea.vmem %s3, %s290
        %p293 = scmp.eq.s32.totalorder %s30, 0
        // Predicated region
        $region45: #{tpu_custom_call.1} parent=35 // pred_check
          %p294 = pneg %p293
        $region46: #{tpu_custom_call.1} parent=35 // pred_check_branch
          %296 = sbr.rel (%p294) target = $region48
        $region47: #{tpu_custom_call.1} parent=35 // pred_region
          %297 = vst [vmem:[#allocation2] sm:$0xff] 0.0
        $region48: #{tpu_custom_call.1} parent=35 // pred_fallthru
          _
        %v298 = vld [vmem:[#allocation2] sm:$0xff]
        %v299 = vld [vmem:[%s250] sm:$0xff]
        %v300 = vld [vmem:[%s250 + $0x8] sm:$0xff]
        %v301 = vld [vmem:[%s259] sm:$0xf]
        %v302 = vld [vmem:[%s259 + $0x4] sm:$0xf]
        %v303 = vld [vmem:[%s259 + $0x8] sm:$0xf]
        %v304 = vld [vmem:[%s259 + $0xc] sm:$0xf]
        %v305 = vld [vmem:[%s259 + $0x10] sm:$0xf]
        %v306 = vld [vmem:[%s259 + $0x14] sm:$0xf]
        %v307 = vld [vmem:[%s259 + $0x18] sm:$0xf]
        %v308 = vld [vmem:[%s259 + $0x1c] sm:$0xf]
        %v309 = vld [vmem:[%s259 + $0x20] sm:$0xf]
        %v310 = vld [vmem:[%s259 + $0x24] sm:$0xf]
        %v311 = vld [vmem:[%s259 + $0x28] sm:$0xf]
        %v312 = vld [vmem:[%s259 + $0x2c] sm:$0xf]
        %v313 = vld [vmem:[%s259 + $0x30] sm:$0xf]
        %v314 = vld [vmem:[%s259 + $0x34] sm:$0xf]
        %v315 = vld [vmem:[%s259 + $0x38] sm:$0xf]
        %v316 = vld [vmem:[%s259 + $0x3c] sm:$0xf]
        %v317 = vld [vmem:[%s259 + $0x40] sm:$0xf]
        %v318 = vld [vmem:[%s259 + $0x44] sm:$0xf]
        %v319 = vld [vmem:[%s259 + $0x48] sm:$0xf]
        %v320 = vld [vmem:[%s259 + $0x4c] sm:$0xf]
        %v321 = vld [vmem:[%s259 + $0x50] sm:$0xf]
        %v322 = vld [vmem:[%s259 + $0x54] sm:$0xf]
        %v323 = vld [vmem:[%s259 + $0x58] sm:$0xf]
        %v324 = vld [vmem:[%s259 + $0x5c] sm:$0xf]
        %v325 = vld [vmem:[%s259 + $0x60] sm:$0xf]
        %v326 = vld [vmem:[%s259 + $0x64] sm:$0xf]
        %v327 = vld [vmem:[%s259 + $0x68] sm:$0xf]
        %v328 = vld [vmem:[%s259 + $0x6c] sm:$0xf]
        %v329 = vld [vmem:[%s259 + $0x70] sm:$0xf]
        %v330 = vld [vmem:[%s259 + $0x74] sm:$0xf]
        %v331 = vld [vmem:[%s259 + $0x78] sm:$0xf]
        %v332 = vld [vmem:[%s259 + $0x7c] sm:$0xf]
        %v333 = vld [vmem:[%s259 + $0x80] sm:$0xf]
        %v334 = vld [vmem:[%s259 + $0x84] sm:$0xf]
        %v335 = vld [vmem:[%s259 + $0x88] sm:$0xf]
        %v336 = vld [vmem:[%s259 + $0x8c] sm:$0xf]
        %v337 = vld [vmem:[%s259 + $0x90] sm:$0xf]
        %v338 = vld [vmem:[%s259 + $0x94] sm:$0xf]
        %v339 = vld [vmem:[%s259 + $0x98] sm:$0xf]
        %v340 = vld [vmem:[%s259 + $0x9c] sm:$0xf]
        %v341 = vld [vmem:[%s259 + $0xa0] sm:$0xf]
        %v342 = vld [vmem:[%s259 + $0xa4] sm:$0xf]
        %v343 = vld [vmem:[%s259 + $0xa8] sm:$0xf]
        %v344 = vld [vmem:[%s259 + $0xac] sm:$0xf]
        %v345 = vld [vmem:[%s259 + $0xb0] sm:$0xf]
        %v346 = vld [vmem:[%s259 + $0xb4] sm:$0xf]
        %v347 = vld [vmem:[%s259 + $0xb8] sm:$0xf]
        %v348 = vld [vmem:[%s259 + $0xbc] sm:$0xf]
        %v349 = vld [vmem:[%s259 + $0xc0] sm:$0xf]
        %v350 = vld [vmem:[%s259 + $0xc4] sm:$0xf]
        %v351 = vld [vmem:[%s259 + $0xc8] sm:$0xf]
        %v352 = vld [vmem:[%s259 + $0xcc] sm:$0xf]
        %v353 = vld [vmem:[%s259 + $0xd0] sm:$0xf]
        %v354 = vld [vmem:[%s259 + $0xd4] sm:$0xf]
        %v355 = vld [vmem:[%s259 + $0xd8] sm:$0xf]
        %v356 = vld [vmem:[%s259 + $0xdc] sm:$0xf]
        %v357 = vld [vmem:[%s259 + $0xe0] sm:$0xf]
        %v358 = vld [vmem:[%s259 + $0xe4] sm:$0xf]
        %v359 = vld [vmem:[%s259 + $0xe8] sm:$0xf]
        %v360 = vld [vmem:[%s259 + $0xec] sm:$0xf]
        %v361 = vld [vmem:[%s259 + $0xf0] sm:$0xf]
        %v362 = vld [vmem:[%s259 + $0xf4] sm:$0xf]
        %v363 = vld [vmem:[%s259 + $0xf8] sm:$0xf]
        %v364 = vld [vmem:[%s259 + $0xfc] sm:$0xf]
        %v367 = vunpack.c.l.b16 %v299
        %v368 = vunpack.c.h.b16 %v299
        %v369 = vunpack.c.l.b16 %v300
        %v370 = vunpack.c.h.b16 %v300
        %v371 = vpack.c.b16 %v367, %v367
        %v372 = vpack.c.b16 %v368, %v368
        %v373 = vpack.c.b16 %v369, %v369
        %v374 = vpack.c.b16 %v370, %v370
        %v443 = vunpack.c.l.b16 %v301
        %v444 = vunpack.c.l.b16 %v302
        %v445 = vunpack.c.l.b16 %v303
        %v446 = vunpack.c.l.b16 %v304
        %v447 = vunpack.c.l.b16 %v305
        %v448 = vunpack.c.l.b16 %v306
        %v449 = vunpack.c.l.b16 %v307
        %v450 = vunpack.c.l.b16 %v308
        %v451 = vunpack.c.l.b16 %v309
        %v452 = vunpack.c.l.b16 %v310
        %v453 = vunpack.c.l.b16 %v311
        %v454 = vunpack.c.l.b16 %v312
        %v455 = vunpack.c.l.b16 %v313
        %v456 = vunpack.c.l.b16 %v314
        %v457 = vunpack.c.l.b16 %v315
        %v458 = vunpack.c.l.b16 %v316
        %v459 = vunpack.c.l.b16 %v317
        %v460 = vunpack.c.l.b16 %v318
        %v461 = vunpack.c.l.b16 %v319
        %v462 = vunpack.c.l.b16 %v320
        %v463 = vunpack.c.l.b16 %v321
        %v464 = vunpack.c.l.b16 %v322
        %v465 = vunpack.c.l.b16 %v323
        %v466 = vunpack.c.l.b16 %v324
        %v467 = vunpack.c.l.b16 %v325
        %v468 = vunpack.c.l.b16 %v326
        %v469 = vunpack.c.l.b16 %v327
        %v470 = vunpack.c.l.b16 %v328
        %v471 = vunpack.c.l.b16 %v329
        %v472 = vunpack.c.l.b16 %v330
        %v473 = vunpack.c.l.b16 %v331
        %v474 = vunpack.c.l.b16 %v332
        %v475 = vunpack.c.l.b16 %v333
        %v476 = vunpack.c.l.b16 %v334
        %v477 = vunpack.c.l.b16 %v335
        %v478 = vunpack.c.l.b16 %v336
        %v479 = vunpack.c.l.b16 %v337
        %v480 = vunpack.c.l.b16 %v338
        %v481 = vunpack.c.l.b16 %v339
        %v482 = vunpack.c.l.b16 %v340
        %v483 = vunpack.c.l.b16 %v341
        %v484 = vunpack.c.l.b16 %v342
        %v485 = vunpack.c.l.b16 %v343
        %v486 = vunpack.c.l.b16 %v344
        %v487 = vunpack.c.l.b16 %v345
        %v488 = vunpack.c.l.b16 %v346
        %v489 = vunpack.c.l.b16 %v347
        %v490 = vunpack.c.l.b16 %v348
        %v491 = vunpack.c.l.b16 %v349
        %v492 = vunpack.c.l.b16 %v350
        %v493 = vunpack.c.l.b16 %v351
        %v494 = vunpack.c.l.b16 %v352
        %v495 = vunpack.c.l.b16 %v353
        %v496 = vunpack.c.l.b16 %v354
        %v497 = vunpack.c.l.b16 %v355
        %v498 = vunpack.c.l.b16 %v356
        %v499 = vunpack.c.l.b16 %v357
        %v500 = vunpack.c.l.b16 %v358
        %v501 = vunpack.c.l.b16 %v359
        %v502 = vunpack.c.l.b16 %v360
        %v503 = vunpack.c.l.b16 %v361
        %v504 = vunpack.c.l.b16 %v362
        %v505 = vunpack.c.l.b16 %v363
        %v506 = vunpack.c.l.b16 %v364
        %v507 = vpack.c.b16 %v444, %v443
        %v508 = vpack.c.b16 %v446, %v445
        %v509 = vpack.c.b16 %v448, %v447
        %v510 = vpack.c.b16 %v450, %v449
        %v511 = vpack.c.b16 %v452, %v451
        %v512 = vpack.c.b16 %v454, %v453
        %v513 = vpack.c.b16 %v456, %v455
        %v514 = vpack.c.b16 %v458, %v457
        %v515 = vpack.c.b16 %v460, %v459
        %v516 = vpack.c.b16 %v462, %v461
        %v517 = vpack.c.b16 %v464, %v463
        %v518 = vpack.c.b16 %v466, %v465
        %v519 = vpack.c.b16 %v468, %v467
        %v520 = vpack.c.b16 %v470, %v469
        %v521 = vpack.c.b16 %v472, %v471
        %v522 = vpack.c.b16 %v474, %v473
        %v523 = vpack.c.b16 %v476, %v475
        %v524 = vpack.c.b16 %v478, %v477
        %v525 = vpack.c.b16 %v480, %v479
        %v526 = vpack.c.b16 %v482, %v481
        %v527 = vpack.c.b16 %v484, %v483
        %v528 = vpack.c.b16 %v486, %v485
        %v529 = vpack.c.b16 %v488, %v487
        %v530 = vpack.c.b16 %v490, %v489
        %v531 = vpack.c.b16 %v492, %v491
        %v532 = vpack.c.b16 %v494, %v493
        %v533 = vpack.c.b16 %v496, %v495
        %v534 = vpack.c.b16 %v498, %v497
        %v535 = vpack.c.b16 %v500, %v499
        %v536 = vpack.c.b16 %v502, %v501
        %v537 = vpack.c.b16 %v504, %v503
        %v538 = vpack.c.b16 %v506, %v505
        %571 = vmatprep.subr.bf16.mxu0 0
        %572 = vmatpush1.bf16.msra.mxu0 %v514
        %573 = vmatprep.subr.bf16.mxu0 0
        %574 = vmatpush1.bf16.msra.mxu0 %v513
        %575 = vmatprep.subr.bf16.mxu0 0
        %576 = vmatpush1.bf16.msra.mxu0 %v512
        %577 = vmatprep.subr.bf16.mxu0 0
        %578 = vmatpush1.bf16.msra.mxu0 %v511
        %579 = vmatprep.subr.bf16.mxu0 0
        %580 = vmatpush1.bf16.msra.mxu0 %v510
        %581 = vmatprep.subr.bf16.mxu0 0
        %582 = vmatpush1.bf16.msra.mxu0 %v509
        %583 = vmatprep.subr.bf16.mxu0 0
        %584 = vmatpush1.bf16.msra.mxu0 %v508
        %585 = vmatprep.subr.bf16.mxu0 0
        %586 = vmatpush1.bf16.msra.mxu0 %v507
        %587 = vmatprep.subr.bf16.mxu0 0
        %588 = vmatpush2.bf16.msra.mxu0 %v522
        %589 = vmatprep.subr.bf16.mxu0 0
        %590 = vmatpush2.bf16.msra.mxu0 %v521
        %591 = vmatprep.subr.bf16.mxu0 0
        %592 = vmatpush2.bf16.msra.mxu0 %v520
        %593 = vmatprep.subr.bf16.mxu0 0
        %594 = vmatpush2.bf16.msra.mxu0 %v519
        %595 = vmatprep.subr.bf16.mxu0 0
        %596 = vmatpush2.bf16.msra.mxu0 %v518
        %597 = vmatprep.subr.bf16.mxu0 0
        %598 = vmatpush2.bf16.msra.mxu0 %v517
        %599 = vmatprep.subr.bf16.mxu0 0
        %600 = vmatpush2.bf16.msra.mxu0 %v516
        %601 = vmatprep.subr.bf16.mxu0 0
        %602 = vmatpush2.bf16.msra.mxu0 %v515
        %603 = vmatprep.mubr.bf16.mxu0 %v372
        %604 = vmatmul.mubr.bf16.gmra.mxu0 %v371
        %v605 = vpop.f32.mrf.mxu0
        %v606 = vadd.f32 0.0, %v605
        %v607 = vpop.f32.mrf.mxu0
        %v608 = vpop.f32.mrf.mxu0
        %v609 = vpop.f32.mrf.mxu0
        %610 = vdwg.mxu0
        %611 = vmatprep.subr.bf16.mxu0 0
        %612 = vmatpush1.bf16.msra.mxu0 %v530
        %613 = vmatprep.subr.bf16.mxu0 0
        %614 = vmatpush1.bf16.msra.mxu0 %v529
        %615 = vmatprep.subr.bf16.mxu0 0
        %616 = vmatpush1.bf16.msra.mxu0 %v528
        %617 = vmatprep.subr.bf16.mxu0 0
        %618 = vmatpush1.bf16.msra.mxu0 %v527
        %619 = vmatprep.subr.bf16.mxu0 0
        %620 = vmatpush1.bf16.msra.mxu0 %v526
        %621 = vmatprep.subr.bf16.mxu0 0
        %622 = vmatpush1.bf16.msra.mxu0 %v525
        %623 = vmatprep.subr.bf16.mxu0 0
        %624 = vmatpush1.bf16.msra.mxu0 %v524
        %625 = vmatprep.subr.bf16.mxu0 0
        %626 = vmatpush1.bf16.msra.mxu0 %v523
        %627 = vmatprep.subr.bf16.mxu0 0
        %628 = vmatpush2.bf16.msra.mxu0 %v538
        %629 = vmatprep.subr.bf16.mxu0 0
        %630 = vmatpush2.bf16.msra.mxu0 %v537
        %631 = vmatprep.subr.bf16.mxu0 0
        %632 = vmatpush2.bf16.msra.mxu0 %v536
        %633 = vmatprep.subr.bf16.mxu0 0
        %634 = vmatpush2.bf16.msra.mxu0 %v535
        %635 = vmatprep.subr.bf16.mxu0 0
        %636 = vmatpush2.bf16.msra.mxu0 %v534
        %637 = vmatprep.subr.bf16.mxu0 0
        %638 = vmatpush2.bf16.msra.mxu0 %v533
        %639 = vmatprep.subr.bf16.mxu0 0
        %640 = vmatpush2.bf16.msra.mxu0 %v532
        %641 = vmatprep.subr.bf16.mxu0 0
        %642 = vmatpush2.bf16.msra.mxu0 %v531
        %643 = vmatprep.mubr.bf16.mxu0 %v374
        %644 = vmatmul.mubr.bf16.gmra.mxu0 %v373
        %v645 = vpop.f32.mrf.mxu0
        %v646 = vadd.f32 %v606, %v645
        %v647 = vpop.f32.mrf.mxu0
        %v648 = vpop.f32.mrf.mxu0
        %v649 = vpop.f32.mrf.mxu0
        %650 = vdwg.mxu0
        %v651 = vadd.f32 %v298, %v646
        %652 = vst [vmem:[#allocation2] sm:$0xff] %v651
        %p653 = scmp.eq.s32.totalorder %s30, 1
        // Predicated region
        $region49: #{tpu_custom_call.1} parent=35 // pred_check
          %p654 = pneg %p653
        $region50: #{tpu_custom_call.1} parent=35 // pred_check_branch
          %656 = sbr.rel (%p654) target = $region52
        $region51: #{tpu_custom_call.1} parent=35 // pred_region
          %v657 = vld [vmem:[#allocation2] sm:$0xff]
          %v658 = vld [vmem:[%s291] sm:$0x1]
          %v660 = vlaneseq
          %v661 = vshrl.u32 %v660, 7
          %v662 = vsub.s32 0, %v661
          %v663 = vrot.slane %v658, %v662
          %v665 = vadd.f32 %v657, %v663
          %s666 = sld [smem:[#allocation3]]
          %v667 = vstv %s666
          %v668 = vmul.f32 %v665, %v667
          %669 = vst [vmem:[#allocation9] sm:$0xff] %v668
        $region52: #{tpu_custom_call.1} parent=35 // pred_fallthru
          _
        // Predicated region
        $region53: #{tpu_custom_call.1} parent=35 // pred_check
          %p670 = pneg %p165
        $region54: #{tpu_custom_call.1} parent=35 // pred_check_branch
          %672 = sbr.rel (%p670) target = $region56
        $region55: #{tpu_custom_call.1} parent=35 // pred_region
          %s674 = ssub.s32 128, 128
          %675 = vsyncadd [#allocation6], %s674
          %s676 = sadd.s32 %s29, %s28
          %s677 = smul.addr %s676, 128
          %s678 = scalar_lea.hbm %s4, %s677
          %s680 = sshll.u32 [#allocation9], 4
          %s681 = int_to_ptr.vmem [resolvable:$true] %s680
          %683 = dma.vmem_to_hbm [thread:$0]  %s681, 128, %s678, [#allocation6]
        $region56: #{tpu_custom_call.1} parent=35 // pred_fallthru
          _
        // Predicated region
        $region57: #{tpu_custom_call.1} parent=35 // pred_check
          %p684 = pneg %p165
        $region58: #{tpu_custom_call.1} parent=35 // pred_check_branch
          %686 = sbr.rel (%p684) target = $region60
        $region59: #{tpu_custom_call.1} parent=35 // pred_region
          %687 = dma.done [#allocation6], 128
        $region60: #{tpu_custom_call.1} parent=35 // pred_fallthru
          _
      $region36: #{tpu_custom_call.1} parent=5 // pred_fallthru
        _
      %p688 = scmp.le.s32.totalorder 2, %s18
      // Predicated region
      $region61: #{tpu_custom_call.1} parent=5 // pred_check
        %p689 = pneg %p688
      $region62: #{tpu_custom_call.1} parent=5 // pred_check_branch
        %691 = sbr.rel (%p689) target = $region64
      $region63: #{tpu_custom_call.1} parent=5 // pred_region
        %s692 = ssub.s32 %s18, 2
      $region64: #{tpu_custom_call.1} parent=5 // pred_fallthru
        _
    $region6: #{tpu_custom_call.1} parent=1 // loop_footer
      %s22 = sadd.s32 1, %s18
    $region7: #{tpu_custom_call.1} parent=1 // loop_footer_branch
      %17 = sbr.rel target = $region3
    $region8: #{tpu_custom_call.1} parent=1 // loop_exit
      _
    %693 = vsyncpa [#allocation5], 1
    %s694 = scalar_lea.sflag [#allocation5], 1
    %695 = vsyncpa %s694, 1
    %696 = vsyncpa [#allocation8], 1
    %s697 = scalar_lea.sflag [#allocation8], 1
    %698 = vsyncpa %s697, 1
    %699 = vsyncpa [#allocation6], 1
    %s700 = scalar_lea.sflag [#allocation6], 1
    %701 = vsyncpa %s700, 1

</llo_original>
